<compile_context>
chip_gen: v7x
topology: tpu7x:2x2x1
jax: 0.10.0
libtpu: 0.0.40
codegen_flags: <defaults>
</compile_context>

<pallas_src>
import functools

import jax
import jax.numpy as jnp
from jax import lax
from jax.experimental import pallas as pl
from jax.experimental.pallas import tpu as pltpu

EPS = 1e-5  # PyTorch LayerNorm default

# Tile-size targets. Re-derive against a 64 MiB VMEM budget on v7x if raised.
_TM, _TN, _TK = 256, 512, 512


def _tile(dim, target):
    """Largest legal tile: full dim if small or non-divisible, else `target`."""
    if dim <= target or dim % target != 0:
        return dim
    return target


# --------------------------------------------------------------------------
# Kernel 1: fused QKV projection (tiled matmul + bias)
# --------------------------------------------------------------------------
def _qkv_matmul_kernel(x_ref, w_ref, b_ref, o_ref, acc_ref):
    @pl.when(pl.program_id(2) == 0)
    def _():
        acc_ref[...] = jnp.zeros_like(acc_ref)

    acc_ref[...] += jnp.dot(
        x_ref[...].astype(jnp.bfloat16), w_ref[...],
        preferred_element_type=jnp.float32)

    @pl.when(pl.program_id(2) == pl.num_programs(2) - 1)
    def _():
        o_ref[...] = acc_ref[...] + b_ref[...]


def qkv_projection(x2d, w_t, b):
    M, K = x2d.shape
    N = w_t.shape[1]
    tm, tn, tk = _tile(M, _TM), _tile(N, _TN), _tile(K, _TK)
    return pl.pallas_call(
        _qkv_matmul_kernel,
        out_shape=jax.ShapeDtypeStruct((M, N), jnp.float32),
        grid=(M // tm, N // tn, K // tk),
        in_specs=[
            pl.BlockSpec((tm, tk), lambda i, j, k: (i, k)),
            pl.BlockSpec((tk, tn), lambda i, j, k: (k, j)),   # bf16 weight tile
            pl.BlockSpec((1, tn), lambda i, j, k: (0, j)),
        ],
        out_specs=pl.BlockSpec((tm, tn), lambda i, j, k: (i, j)),
        scratch_shapes=[pltpu.VMEM((tm, tn), jnp.float32)],
        compiler_params=pltpu.CompilerParams(
            dimension_semantics=("parallel", "parallel", "arbitrary")),
    )(x2d, w_t, b)


# --------------------------------------------------------------------------
# Kernel 2: multi-head attention, all heads of one batch element per step
# --------------------------------------------------------------------------
def _attention_kernel(qkv_ref, o_ref, *, nhead, scale):
    # qkv_ref block: (1, L, 3E) — lane-dense; heads split inside the kernel.
    L = qkv_ref.shape[1]
    E = qkv_ref.shape[2] // 3
    Dh = E // nhead
    qkv = qkv_ref[0]                                   # (L, 3E) f32
    outs = []
    for h in range(nhead):                             # static unroll over heads
        q = qkv[:, h * Dh:(h + 1) * Dh].astype(jnp.bfloat16)
        k = qkv[:, E + h * Dh:E + (h + 1) * Dh].astype(jnp.bfloat16)
        v = qkv[:, 2 * E + h * Dh:2 * E + (h + 1) * Dh].astype(jnp.bfloat16)
        # s = q @ k^T  (contract the Dh dim of both operands)
        s = lax.dot_general(q, k, (((1,), (1,)), ((), ())),
                            preferred_element_type=jnp.float32) * scale
        s = s - jnp.max(s, axis=-1, keepdims=True)     # stable softmax, f32 stats
        p = jnp.exp(s)
        p = p * pl.reciprocal(jnp.sum(p, axis=-1, keepdims=True), approx=True)
        outs.append(jnp.dot(p.astype(jnp.bfloat16), v,
                            preferred_element_type=jnp.float32))
    o_ref[0] = jnp.concatenate(outs, axis=-1)          # (L, E), single lane-dense store


def attention(qkv3, nhead):
    # TODO(synk): for long sequences convert to a flash-style online-softmax loop over
    # KV tiles (O(L*Dh) VMEM) instead of materializing the (L, L) scores per head.
    N, L, E3 = qkv3.shape
    E = E3 // 3
    scale = float(E // nhead) ** -0.5
    return pl.pallas_call(
        functools.partial(_attention_kernel, nhead=nhead, scale=scale),
        out_shape=jax.ShapeDtypeStruct((N, L, E), jnp.float32),
        grid=(N,),
        in_specs=[pl.BlockSpec((1, L, E3), lambda b: (b, 0, 0))],
        out_specs=pl.BlockSpec((1, L, E), lambda b: (b, 0, 0)),
        compiler_params=pltpu.CompilerParams(dimension_semantics=("parallel",)),
    )(qkv3)


# --------------------------------------------------------------------------
# Kernel 3: out-projection + residual add + LayerNorm1 (fused epilogue)
# --------------------------------------------------------------------------
def _proj_add_ln_kernel(a_ref, w_ref, b_ref, res_ref, g_ref, beta_ref, o_ref, acc_ref):
    @pl.when(pl.program_id(1) == 0)
    def _():
        acc_ref[...] = jnp.zeros_like(acc_ref)

    acc_ref[...] += jnp.dot(
        a_ref[...].astype(jnp.bfloat16), w_ref[...],
        preferred_element_type=jnp.float32)

    @pl.when(pl.program_id(1) == pl.num_programs(1) - 1)
    def _():
        z = acc_ref[...] + b_ref[...] + res_ref[...]          # out-proj + residual
        mu = jnp.mean(z, axis=-1, keepdims=True)
        zc = z - mu
        var = jnp.mean(zc * zc, axis=-1, keepdims=True)
        o_ref[...] = zc * lax.rsqrt(var + EPS) * g_ref[...] + beta_ref[...]


def proj_add_layernorm(a, w_t, b, res, gamma, beta):
    M, K = a.shape
    E = w_t.shape[1]
    tm, tk = _tile(M, _TM), _tile(K, _TK)
    return pl.pallas_call(
        _proj_add_ln_kernel,
        out_shape=jax.ShapeDtypeStruct((M, E), jnp.float32),
        grid=(M // tm, K // tk),
        in_specs=[
            pl.BlockSpec((tm, tk), lambda i, k: (i, k)),   # attention output tile
            pl.BlockSpec((tk, E), lambda i, k: (k, 0)),    # W_o^T tile (bf16)
            pl.BlockSpec((1, E), lambda i, k: (0, 0)),     # b_o
            pl.BlockSpec((tm, E), lambda i, k: (i, 0)),    # residual rows (x)
            pl.BlockSpec((1, E), lambda i, k: (0, 0)),     # LN gamma
            pl.BlockSpec((1, E), lambda i, k: (0, 0)),     # LN beta
        ],
        out_specs=pl.BlockSpec((tm, E), lambda i, k: (i, 0)),
        scratch_shapes=[pltpu.VMEM((tm, E), jnp.float32)],
        compiler_params=pltpu.CompilerParams(
            dimension_semantics=("parallel", "arbitrary")),
    )(a, w_t, b, res, gamma, beta)


# --------------------------------------------------------------------------
# Kernel 4: [W1 | beta*W2] matmul + SwiGLU gate + residual + LayerNorm2 (fused)
# --------------------------------------------------------------------------
def _swiglu_add_ln_kernel(x_ref, w_ref, b_ref, res_ref, g_ref, beta_ref, o_ref, acc_ref):
    @pl.when(pl.program_id(1) == 0)
    def _():
        acc_ref[...] = jnp.zeros_like(acc_ref)

    acc_ref[...] += jnp.dot(
        x_ref[...].astype(jnp.bfloat16), w_ref[...],
        preferred_element_type=jnp.float32)

    @pl.when(pl.program_id(1) == pl.num_programs(1) - 1)
    def _():
        E = o_ref.shape[1]
        ab = acc_ref[...] + b_ref[...]                    # [x@W1^T+b1 | beta*(x@W2^T+b2)]
        gate = 0.5 * (jnp.tanh(0.5 * ab[:, E:]) + 1.0)    # numerically-stable sigmoid (EUP tanh)
        z = res_ref[...] + ab[:, :E] * gate               # SwiGLU + residual
        mu = jnp.mean(z, axis=-1, keepdims=True)
        zc = z - mu
        var = jnp.mean(zc * zc, axis=-1, keepdims=True)
        o_ref[...] = zc * lax.rsqrt(var + EPS) * g_ref[...] + beta_ref[...]


def swiglu_add_layernorm(x1, w12_t, b12, gamma, beta):
    M, K = x1.shape
    E = K
    tm, tk = _tile(M, _TM), _tile(K, _TK)
    return pl.pallas_call(
        _swiglu_add_ln_kernel,
        out_shape=jax.ShapeDtypeStruct((M, E), jnp.float32),
        grid=(M // tm, K // tk),
        in_specs=[
            pl.BlockSpec((tm, tk), lambda i, k: (i, k)),      # x1 (matmul operand, K-tiled)
            pl.BlockSpec((tk, 2 * E), lambda i, k: (k, 0)),   # [W1 | beta*W2]^T (bf16)
            pl.BlockSpec((1, 2 * E), lambda i, k: (0, 0)),    # [b1 | beta*b2]
            pl.BlockSpec((tm, E), lambda i, k: (i, 0)),       # x1 (residual rows)
            pl.BlockSpec((1, E), lambda i, k: (0, 0)),        # LN gamma
            pl.BlockSpec((1, E), lambda i, k: (0, 0)),        # LN beta
        ],
        out_specs=pl.BlockSpec((tm, E), lambda i, k: (i, 0)),
        scratch_shapes=[pltpu.VMEM((tm, 2 * E), jnp.float32)],
        compiler_params=pltpu.CompilerParams(
            dimension_semantics=("parallel", "arbitrary")),
    )(x1, w12_t, b12, x1, gamma, beta)


# --------------------------------------------------------------------------
# TransformerBlock forward
# --------------------------------------------------------------------------
def transformer_block(x, p, nhead):
    L, N, E = x.shape
    M = N * L

    # ---- one-time weight prep (PyTorch layout -> TPU-friendly); in a real model this
    # would be done once at load time, not per forward.
    wqkv_t = jnp.concatenate([p["wq"], p["wk"], p["wv"]], axis=0).T.astype(jnp.bfloat16)  # (E, 3E)
    bqkv = jnp.concatenate([p["bq"], p["bk"], p["bv"]]).reshape(1, 3 * E)
    wo_t = p["wo"].T.astype(jnp.bfloat16)                                                 # (E, E)
    bo = p["bo"].reshape(1, E)
    beta = p["sw_beta"]
    # Fold SwiGLU beta into linear2:  sigmoid(beta*(xW2^T+b2)) == sigmoid(x(beta*W2)^T + beta*b2)
    w12_t = jnp.concatenate([p["w1"], beta * p["w2"]], axis=0).T.astype(jnp.bfloat16)     # (E, 2E)
    b12 = jnp.concatenate([p["b1"], beta * p["b2"]]).reshape(1, 2 * E)
    g1, be1 = p["g1"].reshape(1, E), p["be1"].reshape(1, E)
    g2, be2 = p["g2"].reshape(1, E), p["be2"].reshape(1, E)

    # (L, N, E) -> batch-major rows (N*L, E) so per-batch attention blocks are contiguous.
    x2d = jnp.transpose(x, (1, 0, 2)).reshape(M, E)

    qkv = qkv_projection(x2d, wqkv_t, bqkv)                    # (M, 3E) f32
    attn = attention(qkv.reshape(N, L, 3 * E), nhead)          # (N, L, E) f32
    x1 = proj_add_layernorm(attn.reshape(M, E), wo_t, bo, x2d, g1, be1)   # out-proj + res + LN1
    out2d = swiglu_add_layernorm(x1, w12_t, b12, g2, be2)      # SwiGLU + res + LN2

    return out2d.reshape(N, L, E).transpose(1, 0, 2)           # back to (L, N, E)


# --------------------------------------------------------------------------
# Pure-JAX f32 reference (PyTorch semantics) for a correctness sanity check
# --------------------------------------------------------------------------
def transformer_block_ref(x, p, nhead):
    L, N, E = x.shape
    Dh = E // nhead
    scale = float(Dh) ** -0.5
    x2d = x.reshape(L * N, E)

    def lin(t, w, b):
        return t @ w.T + b

    def ln(z, g, b):
        mu = jnp.mean(z, axis=-1, keepdims=True)
        var = jnp.mean((z - mu) ** 2, axis=-1, keepdims=True)
        return (z - mu) / jnp.sqrt(var + EPS) * g + b

    q2d = lin(x2d, p["wq"], p["bq"])
    k2d = lin(x2d, p["wk"], p["bk"])
    v2d = lin(x2d, p["wv"], p["bv"])

    def to_heads(t2d):
        return (t2d.reshape(L, N, nhead, Dh).transpose(1, 2, 0, 3)
                .reshape(N * nhead, L, Dh))

    q, k, v = to_heads(q2d), to_heads(k2d), to_heads(v2d)
    s = jnp.einsum("bqd,bkd->bqk", q, k) * scale
    pmat = jax.nn.softmax(s, axis=-1)
    o = jnp.einsum("bqk,bkd->bqd", pmat, v)
    o2d = o.reshape(N, nhead, L, Dh).transpose(2, 0, 1, 3).reshape(L * N, E)
    attn_out = lin(o2d, p["wo"], p["bo"])
    x1 = ln(x2d + attn_out, p["g1"], p["be1"])
    sw = lin(x1, p["w1"], p["b1"]) * jax.nn.sigmoid(
        p["sw_beta"] * lin(x1, p["w2"], p["b2"]))
    x2 = ln(x1 + sw, p["g2"], p["be2"])
    return x2.reshape(L, N, E)


# --------------------------------------------------------------------------
def init_params(key, d_model):
    keys = jax.random.split(key, 10)
    std = 0.05

    def w(k):
        return (jax.random.normal(k, (d_model, d_model)) * std).astype(jnp.float32)

    def b(k):
        return (jax.random.normal(k, (d_model,)) * std).astype(jnp.float32)

    return {
        "wq": w(keys[0]), "bq": b(keys[1]),
        "wk": w(keys[2]), "bk": b(keys[3]),
        "wv": w(keys[4]), "bv": b(keys[5]),
        "wo": w(keys[6]), "bo": b(keys[7]),
        "g1": jnp.ones((d_model,), jnp.float32),
        "be1": jnp.zeros((d_model,), jnp.float32),
        "g2": jnp.ones((d_model,), jnp.float32),
        "be2": jnp.zeros((d_model,), jnp.float32),
        "w1": w(keys[8]), "b1": jnp.zeros((d_model,), jnp.float32),
        "w2": w(keys[9]), "b2": jnp.zeros((d_model,), jnp.float32),
        "sw_beta": jnp.ones((1,), jnp.float32),  # torch.ones(1)
    }


if __name__ == "__main__":
    L, N, E, H = 8, 2, 32, 4  # seq=8, batch=2, d_model=32, nhead=4
    key = jax.random.PRNGKey(0)
    kx, kp = jax.random.split(key)
    x = jax.random.normal(kx, (L, N, E), dtype=jnp.float32)
    params = init_params(kp, E)

    out = jax.block_until_ready(transformer_block(x, params, H))
    ref = transformer_block_ref(x, params, H)

    assert out.shape == (L, N, E)
    # bf16 MXU operands + approx reciprocal => compare against the f32 reference with
    # a tolerance well below any "structural" error but above bf16 rounding noise.
    assert jnp.allclose(out, ref, atol=5e-2, rtol=5e-2), (
        "mismatch vs reference: max abs err = "
        f"{float(jnp.max(jnp.abs(out - ref)))}")
    print("KERNEL_OK")
</pallas_src>

<mosaic_0001>
module attributes {stable_mosaic.version = 11 : i64} {
  func.func @_qkv_matmul_kernel(%arg0: i32, %arg1: i32, %arg2: i32, %arg3: memref<16x32xf32, #tpu.memory_space<vmem>>, %arg4: memref<32x96xbf16, #tpu.memory_space<vmem>>, %arg5: memref<1x96xf32, #tpu.memory_space<vmem>>, %arg6: memref<16x96xf32, #tpu.memory_space<vmem>>, %arg7: memref<16x96xf32, #tpu.memory_space<vmem>>) attributes {dimension_semantics = [#tpu.dimension_semantics<parallel>, #tpu.dimension_semantics<parallel>, #tpu.dimension_semantics<arbitrary>], iteration_bounds = array<i64: 1, 1, 1>, scalar_prefetch = 0 : i64, scratch_operands = 1 : i64, tpu.core_type = #tpu.core_type<tc>, window_params = [{transform_indices = @transform_0, window_bounds = array<i64: 16, 32>}, {transform_indices = @transform_1, window_bounds = array<i64: 32, 96>}, {transform_indices = @transform_2, window_bounds = array<i64: 1, 96>}, {transform_indices = @transform_3, window_bounds = array<i64: 16, 96>}]} {
    %c0_i32 = arith.constant 0 : i32
    %0 = arith.cmpi eq, %arg2, %c0_i32 : i32
    %1 = arith.extui %0 : i1 to i32
    %c0_i32_0 = arith.constant 0 : i32
    %2 = arith.cmpi ne, %1, %c0_i32_0 : i32
    scf.if %2 {
      %cst_10 = arith.constant 0.000000e+00 : f32
      %13 = vector.broadcast %cst_10 : f32 to vector<16x96xf32>
      %c0_11 = arith.constant 0 : index
      %c0_12 = arith.constant 0 : index
      %14 = vector.load %arg7[%c0_11, %c0_12] : memref<16x96xf32, #tpu.memory_space<vmem>>, vector<16x96xf32>
      tpu.vector_store %arg7[%c0_11, %c0_12], %13 {strides = array<i32>} : memref<16x96xf32, #tpu.memory_space<vmem>>, vector<16x96xf32>,
    } else {
    }
    %c0 = arith.constant 0 : index
    %c0_1 = arith.constant 0 : index
    %3 = vector.load %arg7[%c0, %c0_1] : memref<16x96xf32, #tpu.memory_space<vmem>>, vector<16x96xf32>
    %c0_2 = arith.constant 0 : index
    %c0_3 = arith.constant 0 : index
    %4 = vector.load %arg3[%c0_2, %c0_3] : memref<16x32xf32, #tpu.memory_space<vmem>>, vector<16x32xf32>
    %5 = arith.truncf %4 : vector<16x32xf32> to vector<16x32xbf16>
    %c0_4 = arith.constant 0 : index
    %c0_5 = arith.constant 0 : index
    %6 = vector.load %arg4[%c0_4, %c0_5] : memref<32x96xbf16, #tpu.memory_space<vmem>>, vector<32x96xbf16>
    %cst = arith.constant dense<0.000000e+00> : vector<16x96xf32>
    %7 = tpu.matmul %5, %6, %cst {dimension_numbers = #tpu.dot_dimension_numbers<[1], [0], [0], [1], [0, 0, 1, 1], [], []>} : vector<16x32xbf16>, vector<32x96xbf16>, vector<16x96xf32> -> vector<16x96xf32>
    %8 = arith.addf %3, %7 : vector<16x96xf32>
    %c0_6 = arith.constant 0 : index
    %c0_7 = arith.constant 0 : index
    %9 = vector.load %arg7[%c0_6, %c0_7] : memref<16x96xf32, #tpu.memory_space<vmem>>, vector<16x96xf32>
    tpu.vector_store %arg7[%c0_6, %c0_7], %8 {strides = array<i32>} : memref<16x96xf32, #tpu.memory_space<vmem>>, vector<16x96xf32>,
    %c0_i32_8 = arith.constant 0 : i32
    %10 = arith.cmpi eq, %arg2, %c0_i32_8 : i32
    %11 = arith.extui %10 : i1 to i32
    %c0_i32_9 = arith.constant 0 : i32
    %12 = arith.cmpi ne, %11, %c0_i32_9 : i32
    scf.if %12 {
      %c0_10 = arith.constant 0 : index
      %c0_11 = arith.constant 0 : index
      %13 = vector.load %arg7[%c0_10, %c0_11] : memref<16x96xf32, #tpu.memory_space<vmem>>, vector<16x96xf32>
      %c0_12 = arith.constant 0 : index
      %c0_13 = arith.constant 0 : index
      %14 = vector.load %arg5[%c0_12, %c0_13] : memref<1x96xf32, #tpu.memory_space<vmem>>, vector<1x96xf32>
      %15 = vector.broadcast %14 : vector<1x96xf32> to vector<16x96xf32>
      %16 = arith.addf %13, %15 : vector<16x96xf32>
      %c0_14 = arith.constant 0 : index
      %c0_15 = arith.constant 0 : index
      %17 = vector.load %arg6[%c0_14, %c0_15] : memref<16x96xf32, #tpu.memory_space<vmem>>, vector<16x96xf32>
      tpu.vector_store %arg6[%c0_14, %c0_15], %16 {strides = array<i32>} : memref<16x96xf32, #tpu.memory_space<vmem>>, vector<16x96xf32>,
    } else {
    }
    return
  }
  func.func @transform_0(%arg0: i32, %arg1: i32, %arg2: i32) -> (i32, i32) {
    %c0_i32 = arith.constant 0 : i32
    return %arg0, %arg2 : i32, i32
  }
  func.func @transform_1(%arg0: i32, %arg1: i32, %arg2: i32) -> (i32, i32) {
    %c0_i32 = arith.constant 0 : i32
    return %arg2, %arg1 : i32, i32
  }
  func.func @transform_2(%arg0: i32, %arg1: i32, %arg2: i32) -> (i32, i32) {
    %c0_i32 = arith.constant 0 : i32
    %c0_i32_0 = arith.constant 0 : i32
    return %c0_i32, %arg1 : i32, i32
  }
  func.func @transform_3(%arg0: i32, %arg1: i32, %arg2: i32) -> (i32, i32) {
    %c0_i32 = arith.constant 0 : i32
    return %arg0, %arg1 : i32, i32
  }
}

</mosaic_0001>

<llo_original>
// kernel: tpu_custom_call.1
$region0: #{tpu_custom_call.1}
  #allocation0 [shape = 'u32[]', space=smem, size = 0x4, offset = 0x4, fixed_abs, tag = 'smem constant byte address 0x4 - core index']
  #allocation1 [shape = 'u32[144,128]{1,0:T(1,128)}', space=vmem, size = 0x12000, scoped, tag = 'internal scratch']
  #allocation2 [shape = 'f32[16,96]{1,0:T(8,128)}', space=vmem, size = 0x2000, scoped, tag = 'scratch operand']
  %s0 = inlined_call_operand.hbm [shape: f32[16,32], index: 0, kind: input, shape index: {}]
  %s1 = inlined_call_operand.hbm [shape: bf16[32,96], index: 1, kind: input, shape index: {}]
  %s2 = inlined_call_operand.vmem [shape: f32[1,96], index: 2, kind: input, shape index: {}]
  %s3 = inlined_call_operand.hbm [shape: f32[16,96], index: 3, kind: output, shape index: {}]
  %s4 = sld [smem:[#allocation0]]
  $region38: #{tpu_custom_call.1} parent=0
    _
  %s6 = ssub.s32 1, %s4
  %s7 = scalar_select 0, %s6, %s4
  $region1: #{tpu_custom_call.1} parent=0
    #allocation3 [shape = 'u8[8192]{0}', space=vmem, size = 0x2000, scoped, tag = 'input window, operand 0, single buffered']
    #allocation4 [shape = 's32[1]{0}', space=sflag, size = 0x4, scoped, tag = 'scoped memory for tpu_custom_call.1']
    #allocation5 [shape = 's32[1]{0}', space=sflag, size = 0x4, scoped, tag = 'scoped memory for tpu_custom_call.1']
    #allocation6 [shape = 'u8[8192]{0}', space=vmem, size = 0x2000, scoped, tag = 'input window, operand 1, single buffered']
    #allocation7 [shape = 's32[1]{0}', space=sflag, size = 0x4, scoped, tag = 'scoped memory for tpu_custom_call.1']
    #allocation8 [shape = 'u8[8192]{0}', space=vmem, size = 0x2000, scoped, tag = 'output window, operand 0, single buffered']
    %8 = vsyncpa [#allocation4], 0
    %9 = vsyncpa [#allocation7], 0
    %10 = vsyncpa [#allocation5], 0
    // Predicated region
    $region2: #{tpu_custom_call.1} parent=1 // pred_check
      _
    $region3: #{tpu_custom_call.1} parent=1 // pred_check_branch
      %12 = sbr.rel (0) target = $region5
    $region4: #{tpu_custom_call.1} parent=1 // pred_region
      %s14 = ssub.s32 256, 256
      %15 = vsyncadd [#allocation4], %s14
      %s16 = sshll.u32 [#allocation3], 4
      %s17 = int_to_ptr.vmem [resolvable:$true] %s16
      %22 = dma.hbm_to_vmem [thread:$0]  %s0, 256, %s17, [#allocation4], 128, 128, 8
    $region5: #{tpu_custom_call.1} parent=1 // pred_fallthru
      _
    // Predicated region
    $region6: #{tpu_custom_call.1} parent=1 // pred_check
      _
    $region7: #{tpu_custom_call.1} parent=1 // pred_check_branch
      %24 = sbr.rel (0) target = $region9
    $region8: #{tpu_custom_call.1} parent=1 // pred_region
      %s26 = ssub.s32 256, 256
      %27 = vsyncadd [#allocation7], %s26
      %s28 = sshll.u32 [#allocation6], 4
      %s29 = int_to_ptr.vmem [resolvable:$true] %s28
      %34 = dma.hbm_to_vmem [thread:$0]  %s1, 256, %s29, [#allocation7], 64, 64, 4
    $region9: #{tpu_custom_call.1} parent=1 // pred_fallthru
      _
    // Predicated region
    $region10: #{tpu_custom_call.1} parent=1 // pred_check
      _
    $region11: #{tpu_custom_call.1} parent=1 // pred_check_branch
      %36 = sbr.rel (0) target = $region13
    $region12: #{tpu_custom_call.1} parent=1 // pred_region
      _
    $region13: #{tpu_custom_call.1} parent=1 // pred_fallthru
      _
    // Predicated region
    $region14: #{tpu_custom_call.1} parent=1 // pred_check
      _
    $region15: #{tpu_custom_call.1} parent=1 // pred_check_branch
      %38 = sbr.rel (0) target = $region17
    $region16: #{tpu_custom_call.1} parent=1 // pred_region
      %39 = dma.done [#allocation4], 256
    $region17: #{tpu_custom_call.1} parent=1 // pred_fallthru
      _
    // Predicated region
    $region18: #{tpu_custom_call.1} parent=1 // pred_check
      _
    $region19: #{tpu_custom_call.1} parent=1 // pred_check_branch
      %41 = sbr.rel (0) target = $region21
    $region20: #{tpu_custom_call.1} parent=1 // pred_region
      %42 = dma.done [#allocation7], 256
    $region21: #{tpu_custom_call.1} parent=1 // pred_fallthru
      _
    %p44 = scmp.eq.s32.totalorder 0, 0
    // Predicated region
    $region22: #{tpu_custom_call.1} parent=1 // pred_check
      %p45 = pneg %p44
    $region23: #{tpu_custom_call.1} parent=1 // pred_check_branch
      %47 = sbr.rel (%p45) target = $region25
    $region24: #{tpu_custom_call.1} parent=1 // pred_region
      %vm48 = vcmask 785408
      %49 = vst.msk [vmem:[#allocation2] sm:$0xff] %vm48, 0.0
      %50 = vst.msk [vmem:[#allocation2 + $0x8] sm:$0xff] %vm48, 0.0
    $region25: #{tpu_custom_call.1} parent=1 // pred_fallthru
      _
    %v51 = vld [vmem:[#allocation2] sm:$0xff]
    %v52 = vld [vmem:[#allocation2 + $0x8] sm:$0xff]
    %v53 = vld [vmem:[#allocation3] sm:$0xff]
    %v54 = vld [vmem:[#allocation3 + $0x8] sm:$0xff]
    %v55 = vpack.c.bf16 %v54, %v53
    %v56 = vld [vmem:[#allocation6] sm:$0xf]
    %v57 = vld [vmem:[#allocation6 + $0x4] sm:$0xf]
    %v58 = vld [vmem:[#allocation6 + $0x8] sm:$0xf]
    %v59 = vld [vmem:[#allocation6 + $0xc] sm:$0xf]
    %v64 = vunpack.c.l.b16 %v56
    %v65 = vunpack.c.l.b16 %v57
    %v66 = vunpack.c.l.b16 %v58
    %v67 = vunpack.c.l.b16 %v59
    %v68 = vpack.c.b16 %v65, %v64
    %v69 = vpack.c.b16 %v67, %v66
    %vm72 = vcmask 261120
    %v74 = vsel %vm72, %v55, 0
    %76 = vmatprep.subr.bf16.mxu0 0
    %77 = vmatpush1.bf16.msra.mxu0 %v68
    %78 = vmatprep.subr.bf16.mxu0 0
    %79 = vmatpush1.bf16.msra.mxu0 %v69
    %80 = vmatprep.subr.bf16.mxu0 0
    %81 = vmatpush1.bf16.msra.mxu0 0
    %82 = vmatprep.subr.bf16.mxu0 0
    %83 = vmatpush1.bf16.msra.mxu0 0
    %84 = vmatprep.subr.bf16.mxu0 0
    %85 = vmatpush1.bf16.msra.mxu0 0
    %86 = vmatprep.subr.bf16.mxu0 0
    %87 = vmatpush1.bf16.msra.mxu0 0
    %88 = vmatprep.subr.bf16.mxu0 0
    %89 = vmatpush1.bf16.msra.mxu0 0
    %90 = vmatprep.subr.bf16.mxu0 0
    %91 = vmatpush1.bf16.msra.mxu0 0
    %92 = vmatprep.subr.bf16.mxu0 0
    %93 = vmatpush1.bf16.msra.mxu0 0
    %94 = vmatprep.subr.bf16.mxu0 0
    %95 = vmatpush1.bf16.msra.mxu0 0
    %96 = vmatprep.subr.bf16.mxu0 0
    %97 = vmatpush1.bf16.msra.mxu0 0
    %98 = vmatprep.subr.bf16.mxu0 0
    %99 = vmatpush1.bf16.msra.mxu0 0
    %100 = vmatprep.subr.bf16.mxu0 0
    %101 = vmatpush1.bf16.msra.mxu0 0
    %102 = vmatprep.subr.bf16.mxu0 0
    %103 = vmatpush1.bf16.msra.mxu0 0
    %104 = vmatprep.subr.bf16.mxu0 0
    %105 = vmatpush1.bf16.msra.mxu0 0
    %106 = vmatprep.subr.bf16.mxu0 0
    %107 = vmatpush1.bf16.msra.mxu0 0
    %108 = vmatprep.mubr.bf16.mxu0 0
    %109 = vmatmul.mubr.bf16.gmra.mrb[0].mxu0 %v74
    %v110 = vpop.f32.mrb[0].mxu0
    %v111 = vadd.f32 0.0, %v110
    %v112 = vpop.f32.mrb[0].mxu0
    %v113 = vpop.f32.mrb[0].mxu0
    %v114 = vadd.f32 0.0, %v113
    %v115 = vpop.f32.mrb[0].mxu0
    %116 = vdwg.mxu0
    %v117 = vadd.f32 %v51, %v111
    %v118 = vadd.f32 %v52, %v114
    %vm119 = vcmask 785408
    %120 = vst.msk [vmem:[#allocation2] sm:$0xff] %vm119, %v117
    %121 = vst.msk [vmem:[#allocation2 + $0x8] sm:$0xff] %vm119, %v118
    // Predicated region
    $region26: #{tpu_custom_call.1} parent=1 // pred_check
      %p122 = pneg %p44
    $region27: #{tpu_custom_call.1} parent=1 // pred_check_branch
      %124 = sbr.rel (%p122) target = $region29
    $region28: #{tpu_custom_call.1} parent=1 // pred_region
      %v125 = vld [vmem:[#allocation2] sm:$0xff]
      %v126 = vld [vmem:[#allocation2 + $0x8] sm:$0xff]
      %v127 = vld [vmem:[%s2] sm:$0x1]
      %v129 = vlaneseq
      %v130 = vshrl.u32 %v129, 7
      %v131 = vsub.s32 0, %v130
      %v132 = vrot.slane %v127, %v131
      %v134 = vadd.f32 %v125, %v132
      %v135 = vadd.f32 %v126, %v132
      %136 = vst.msk [vmem:[#allocation8] sm:$0xff] %vm119, %v134
      %137 = vst.msk [vmem:[#allocation8 + $0x8] sm:$0xff] %vm119, %v135
    $region29: #{tpu_custom_call.1} parent=1 // pred_fallthru
      _
    // Predicated region
    $region30: #{tpu_custom_call.1} parent=1 // pred_check
      _
    $region31: #{tpu_custom_call.1} parent=1 // pred_check_branch
      %139 = sbr.rel (0) target = $region33
    $region32: #{tpu_custom_call.1} parent=1 // pred_region
      %s141 = ssub.s32 256, 256
      %142 = vsyncadd [#allocation5], %s141
      %s143 = sshll.u32 [#allocation8], 4
      %s144 = int_to_ptr.vmem [resolvable:$true] %s143
      %149 = dma.vmem_to_hbm [thread:$0]  %s144, 256, %s3, [#allocation5], 128, 128, 8
    $region33: #{tpu_custom_call.1} parent=1 // pred_fallthru
      _
    // Predicated region
    $region34: #{tpu_custom_call.1} parent=1 // pred_check
      _
    $region35: #{tpu_custom_call.1} parent=1 // pred_check_branch
      %151 = sbr.rel (0) target = $region37
    $region36: #{tpu_custom_call.1} parent=1 // pred_region
      %152 = dma.done [#allocation5], 256
    $region37: #{tpu_custom_call.1} parent=1 // pred_fallthru
      _
    %153 = vsyncpa [#allocation4], 1
    %154 = vsyncpa [#allocation7], 1
    %155 = vsyncpa [#allocation5], 1

</llo_original>
